<compile_context>
chip_gen: v7x
topology: tpu7x:2x2x1
jax: 0.10.0
libtpu: 0.0.40
codegen_flags: <defaults>
</compile_context>

<pallas_src>
import functools
import math

import jax
import jax.numpy as jnp
from jax.experimental import pallas as pl
from jax.experimental.pallas import tpu as pltpu


def _round_up(x, m):
    return (x + m - 1) // m * m


def _mlp_fused_kernel(*refs, num_layers):
    """Fused MLP: Linear + ReLU for every layer, all inside one kernel call.

    refs layout (in_refs..., out_refs..., scratch_refs...):
      refs[0]                 x_ref   (tm, X_pad)          bf16 padded input tile
      refs[1 : 1+L]           w_refs  (K_pad_l, N_pad_l)   bf16 padded, pre-transposed weights
      refs[1+L : 1+2L]        b_refs  (1, N_pad_l)         f32 padded biases
      refs[1+2L]              o_ref   (tm, O_pad)          output tile
      refs[2+2L]              h_ref   (tm, H_pad)          bf16 VMEM resident activation
    """
    x_ref = refs[0]
    w_refs = refs[1:1 + num_layers]
    b_refs = refs[1 + num_layers:1 + 2 * num_layers]
    o_ref = refs[1 + 2 * num_layers]
    h_ref = refs[2 + 2 * num_layers]

    for l in range(num_layers):  # static unroll over layers (L is small)
        k_pad, n_pad = w_refs[l].shape
        # Per-layer padded widths: static 128-aligned slices are free views, so
        # the MXU / VPU never grind through lanes padded for *other* layers.
        lhs = x_ref[...] if l == 0 else h_ref[:, :k_pad]          # bf16 operand
        acc = jnp.dot(lhs, w_refs[l][...],
                      preferred_element_type=jnp.float32)          # f32 accumulate
        act = jnp.maximum(acc + b_refs[l][...], 0.0)               # f32 bias + ReLU
        if l == num_layers - 1:
            o_ref[...] = act.astype(o_ref.dtype)                   # last layer -> output tile
        else:
            h_ref[:, :n_pad] = act.astype(h_ref.dtype)             # bf16 resident activation


def prepare_mlp_params(params):
    """One-time padding of per-layer params (hoisted out of the forward pass).

    params: list of (w_t, b) with w_t pre-transposed to (in_d, out_d), so each
    layer is y = relu(x @ w_t + b), matching nn.Linear (y = x @ W.T + b).
    Returns list of (w_pad bf16 (K_pad, N_pad), b_pad f32 (1, N_pad), in_d, out_d).
    Zero padding is semantics-preserving: padded rows/cols/bias lanes are 0 and
    relu(0) == 0, so padding lanes stay 0 through every layer.
    """
    prepared = []
    for (w_t, b) in params:
        in_d, out_d = w_t.shape
        kp, npad = _round_up(in_d, 128), _round_up(out_d, 128)
        w_pad = jnp.zeros((kp, npad), jnp.bfloat16).at[:in_d, :out_d].set(
            w_t.astype(jnp.bfloat16))
        b_pad = jnp.zeros((1, npad), jnp.float32).at[0, :out_d].set(
            b.astype(jnp.float32))
        prepared.append((w_pad, b_pad, in_d, out_d))
    return prepared


def _vmem_capacity_bytes():
    try:
        return int(pltpu.get_tpu_info().vmem_capacity_bytes)
    except Exception:
        return 64 * 1024 * 1024  # conservative (v7x-sized) fallback


def mlp_forward(x, prepared):
    """Forward pass of MLP (Linear + ReLU per layer) as one fused Pallas kernel."""
    if len(prepared) == 0:
        return x  # nn.Identity()

    B, input_dim = x.shape
    L = len(prepared)
    assert prepared[0][2] == input_dim, "input_dim mismatch with prepared params"
    dims = [input_dim] + [out_d for (_, _, _, out_d) in prepared]

    X_pad = _round_up(input_dim, 128)                 # input tile width
    O_pad = _round_up(dims[-1], 128)                  # output tile width
    # Resident activation scratch only holds INTERMEDIATE layer outputs.
    H_pad = max([_round_up(d, 128) for d in dims[1:-1]], default=128)

    vmem_cap = _vmem_capacity_bytes()
    budget = int(vmem_cap * 0.80)                     # ~51 MiB v7x, ~102 MiB v5e/v6e

    # Batch tile: aim for >=2 grid steps when the batch allows (keeps both v7x
    # TensorCores busy); allow bigger tiles on the 128 MiB parts.
    tm_cap = 256 if vmem_cap <= 64 * 1024 * 1024 else 512
    B8 = _round_up(B, 8)
    tm = min(tm_cap, _round_up(max(8, -(-B8 // 2)), 8))
    B_pad = _round_up(B, tm)

    out_itemsize = jnp.dtype(x.dtype).itemsize
    w_bytes = sum(int(w.size) * 2 for (w, _, _, _) in prepared)   # bf16, single-buffered
    b_bytes = sum(int(b.size) * 4 for (_, b, _, _) in prepared)   # f32
    est_vmem = (
        2 * tm * X_pad * 2                 # x tile (bf16), double-buffered
        + 2 * tm * O_pad * out_itemsize    # out tile, double-buffered
        + w_bytes + b_bytes                # grid-invariant weights/biases (single-buffered)
        + tm * H_pad * 2                   # bf16 activation scratch
    )
    assert est_vmem < budget, (
        "MLP too large for the fused weights-resident kernel on this chip; "
        "shrink layer dims or switch to a K/N-tiled variant."
    )
    # TODO(synk): for layer dims of several thousand, tile each layer over (K, N)
    # instead of keeping every padded weight resident in VMEM.

    x_pad = jnp.zeros((B_pad, X_pad), jnp.bfloat16).at[:B, :input_dim].set(
        x.astype(jnp.bfloat16))

    def build(single_buffer_weights):
        pm = {"pipeline_mode": pl.Buffered(1)} if single_buffer_weights else {}
        in_specs = [pl.BlockSpec((tm, X_pad), lambda i: (i, 0))]       # x batch tile
        for (w_pad, _, _, _) in prepared:                              # invariant weights
            kp, npad = w_pad.shape
            in_specs.append(pl.BlockSpec((kp, npad), lambda i: (0, 0), **pm))
        for (_, b_pad, _, _) in prepared:                              # invariant biases
            npad = b_pad.shape[1]
            in_specs.append(pl.BlockSpec((1, npad), lambda i: (0, 0), **pm))
        return pl.pallas_call(
            functools.partial(_mlp_fused_kernel, num_layers=L),
            out_shape=jax.ShapeDtypeStruct((B_pad, O_pad), x.dtype),
            grid_spec=pltpu.PrefetchScalarGridSpec(
                num_scalar_prefetch=0,
                grid=(B_pad // tm,),
                in_specs=in_specs,
                out_specs=pl.BlockSpec((tm, O_pad), lambda i: (i, 0)),
                scratch_shapes=[pltpu.VMEM((tm, H_pad), jnp.bfloat16)],
            ),
            compiler_params=pltpu.CompilerParams(
                dimension_semantics=("parallel",),   # batch tiles shard across TCs (v7x)
                vmem_limit_bytes=budget,             # unlock the weights-resident budget
            ),
        )

    operands = ([x_pad]
                + [w for (w, _, _, _) in prepared]
                + [b for (_, b, _, _) in prepared])
    try:
        # Preferred: grid-invariant weights/biases single-buffered (VMEM saving).
        out_pad = jax.block_until_ready(build(True)(*operands))
    except Exception:
        # Fallback if this JAX build rejects pipeline_mode on a top-level BlockSpec.
        out_pad = build(False)(*operands)

    # Strip padding: valid batch rows and the final layer's true width.
    return out_pad[:B, :dims[-1]]


def init_mlp_params(key, input_dim, layer_dims):
    """Deterministic init mirroring nn.Linear default (uniform +/- 1/sqrt(fan_in))."""
    params = []
    in_d = input_dim
    for out_d in layer_dims:
        key, kw, kb = jax.random.split(key, 3)
        bound = 1.0 / math.sqrt(in_d)
        # weight stored pre-transposed: (in_d, out_d)
        w_t = jax.random.uniform(kw, (in_d, out_d), jnp.float32, -bound, bound)
        b = jax.random.uniform(kb, (out_d,), jnp.float32, -bound, bound)
        params.append((w_t, b))
        in_d = out_d
    return params


def _ref_forward(x, params):
    h = x
    for (w_t, b) in params:
        h = jnp.maximum(h @ w_t + b, 0.0)
    return h


if __name__ == "__main__":
    key = jax.random.PRNGKey(0)

    # Case 1: batch=8, 32 -> 64 -> 32 (single grid step).
    key, kx1, kp1 = jax.random.split(key, 3)
    x1 = jax.random.normal(kx1, (8, 32), jnp.float32)
    params1 = init_mlp_params(kp1, 32, [64, 32])
    prep1 = prepare_mlp_params(params1)          # one-time padding (hoisted)
    out1 = jax.block_until_ready(mlp_forward(x1, prep1))
    ref1 = _ref_forward(x1, params1)
    assert out1.shape == (8, 32)
    assert jnp.allclose(out1, ref1, atol=5e-2, rtol=5e-2), float(
        jnp.max(jnp.abs(out1 - ref1)))

    # Case 2: batch=16 (>= 2 grid steps), ragged widths 48 -> 96 -> 24.
    key, kx2, kp2 = jax.random.split(key, 3)
    x2 = jax.random.normal(kx2, (16, 48), jnp.float32)
    params2 = init_mlp_params(kp2, 48, [96, 24])
    prep2 = prepare_mlp_params(params2)
    out2 = jax.block_until_ready(mlp_forward(x2, prep2))
    ref2 = _ref_forward(x2, params2)
    assert out2.shape == (16, 24)
    assert jnp.allclose(out2, ref2, atol=5e-2, rtol=5e-2), float(
        jnp.max(jnp.abs(out2 - ref2)))

    # Identity case (empty layer_dims) behaves like nn.Identity().
    out_id = mlp_forward(x1, prepare_mlp_params([]))
    assert out_id.shape == x1.shape

    print("KERNEL_OK")
</pallas_src>

<mosaic_0001>
module attributes {stable_mosaic.version = 11 : i64} {
  func.func @_mlp_fused_kernel(%arg0: i32, %arg1: memref<8x128xbf16, #tpu.memory_space<vmem>>, %arg2: memref<128x128xbf16, #tpu.memory_space<vmem>>, %arg3: memref<128x128xbf16, #tpu.memory_space<vmem>>, %arg4: memref<1x128xf32, #tpu.memory_space<vmem>>, %arg5: memref<1x128xf32, #tpu.memory_space<vmem>>, %arg6: memref<8x128xf32, #tpu.memory_space<vmem>>, %arg7: memref<8x128xbf16, #tpu.memory_space<vmem>>) attributes {dimension_semantics = [#tpu.dimension_semantics<parallel>], iteration_bounds = array<i64: 1>, scalar_prefetch = 0 : i64, scratch_operands = 1 : i64, tpu.core_type = #tpu.core_type<tc>, window_params = [{transform_indices = @transform_0, window_bounds = array<i64: 8, 128>}, {pipeline_mode = #tpu.pipeline_mode<synchronous>, transform_indices = @transform_1, window_bounds = array<i64: 128, 128>}, {pipeline_mode = #tpu.pipeline_mode<synchronous>, transform_indices = @transform_2, window_bounds = array<i64: 128, 128>}, {pipeline_mode = #tpu.pipeline_mode<synchronous>, transform_indices = @transform_3, window_bounds = array<i64: 1, 128>}, {pipeline_mode = #tpu.pipeline_mode<synchronous>, transform_indices = @transform_4, window_bounds = array<i64: 1, 128>}, {transform_indices = @transform_5, window_bounds = array<i64: 8, 128>}]} {
    %c0 = arith.constant 0 : index
    %c0_0 = arith.constant 0 : index
    %0 = vector.load %arg1[%c0, %c0_0] : memref<8x128xbf16, #tpu.memory_space<vmem>>, vector<8x128xbf16>
    %c0_1 = arith.constant 0 : index
    %c0_2 = arith.constant 0 : index
    %1 = vector.load %arg2[%c0_1, %c0_2] : memref<128x128xbf16, #tpu.memory_space<vmem>>, vector<128x128xbf16>
    %cst = arith.constant dense<0.000000e+00> : vector<8x128xf32>
    %2 = tpu.matmul %0, %1, %cst {dimension_numbers = #tpu.dot_dimension_numbers<[1], [0], [0], [1], [0, 0, 1, 1], [], []>} : vector<8x128xbf16>, vector<128x128xbf16>, vector<8x128xf32> -> vector<8x128xf32>
    %c0_3 = arith.constant 0 : index
    %c0_4 = arith.constant 0 : index
    %3 = vector.load %arg4[%c0_3, %c0_4] : memref<1x128xf32, #tpu.memory_space<vmem>>, vector<1x128xf32>
    %4 = vector.broadcast %3 : vector<1x128xf32> to vector<8x128xf32>
    %5 = arith.addf %2, %4 : vector<8x128xf32>
    %cst_5 = arith.constant 0.000000e+00 : f32
    %6 = vector.broadcast %cst_5 : f32 to vector<8x128xf32>
    %7 = arith.maximumf %5, %6 : vector<8x128xf32>
    %8 = arith.truncf %7 : vector<8x128xf32> to vector<8x128xbf16>
    %c0_6 = arith.constant 0 : index
    %c0_7 = arith.constant 0 : index
    %9 = vector.load %arg7[%c0_6, %c0_7] : memref<8x128xbf16, #tpu.memory_space<vmem>>, vector<8x128xbf16>
    tpu.vector_store %arg7[%c0_6, %c0_7], %8 {strides = array<i32>} : memref<8x128xbf16, #tpu.memory_space<vmem>>, vector<8x128xbf16>,
    %c0_8 = arith.constant 0 : index
    %c0_9 = arith.constant 0 : index
    %10 = vector.load %arg7[%c0_8, %c0_9] : memref<8x128xbf16, #tpu.memory_space<vmem>>, vector<8x128xbf16>
    %c0_10 = arith.constant 0 : index
    %c0_11 = arith.constant 0 : index
    %11 = vector.load %arg3[%c0_10, %c0_11] : memref<128x128xbf16, #tpu.memory_space<vmem>>, vector<128x128xbf16>
    %cst_12 = arith.constant dense<0.000000e+00> : vector<8x128xf32>
    %12 = tpu.matmul %10, %11, %cst_12 {dimension_numbers = #tpu.dot_dimension_numbers<[1], [0], [0], [1], [0, 0, 1, 1], [], []>} : vector<8x128xbf16>, vector<128x128xbf16>, vector<8x128xf32> -> vector<8x128xf32>
    %c0_13 = arith.constant 0 : index
    %c0_14 = arith.constant 0 : index
    %13 = vector.load %arg5[%c0_13, %c0_14] : memref<1x128xf32, #tpu.memory_space<vmem>>, vector<1x128xf32>
    %14 = vector.broadcast %13 : vector<1x128xf32> to vector<8x128xf32>
    %15 = arith.addf %12, %14 : vector<8x128xf32>
    %cst_15 = arith.constant 0.000000e+00 : f32
    %16 = vector.broadcast %cst_15 : f32 to vector<8x128xf32>
    %17 = arith.maximumf %15, %16 : vector<8x128xf32>
    %c0_16 = arith.constant 0 : index
    %c0_17 = arith.constant 0 : index
    %18 = vector.load %arg6[%c0_16, %c0_17] : memref<8x128xf32, #tpu.memory_space<vmem>>, vector<8x128xf32>
    tpu.vector_store %arg6[%c0_16, %c0_17], %17 {strides = array<i32>} : memref<8x128xf32, #tpu.memory_space<vmem>>, vector<8x128xf32>,
    return
  }
  func.func @transform_0(%arg0: i32) -> (i32, i32) {
    %c0_i32 = arith.constant 0 : i32
    %c0_i32_0 = arith.constant 0 : i32
    return %arg0, %c0_i32 : i32, i32
  }
  func.func @transform_1(%arg0: i32) -> (i32, i32) {
    %c0_i32 = arith.constant 0 : i32
    %c0_i32_0 = arith.constant 0 : i32
    %c0_i32_1 = arith.constant 0 : i32
    return %c0_i32, %c0_i32_0 : i32, i32
  }
  func.func @transform_2(%arg0: i32) -> (i32, i32) {
    %c0_i32 = arith.constant 0 : i32
    %c0_i32_0 = arith.constant 0 : i32
    %c0_i32_1 = arith.constant 0 : i32
    return %c0_i32, %c0_i32_0 : i32, i32
  }
  func.func @transform_3(%arg0: i32) -> (i32, i32) {
    %c0_i32 = arith.constant 0 : i32
    %c0_i32_0 = arith.constant 0 : i32
    %c0_i32_1 = arith.constant 0 : i32
    return %c0_i32, %c0_i32_0 : i32, i32
  }
  func.func @transform_4(%arg0: i32) -> (i32, i32) {
    %c0_i32 = arith.constant 0 : i32
    %c0_i32_0 = arith.constant 0 : i32
    %c0_i32_1 = arith.constant 0 : i32
    return %c0_i32, %c0_i32_0 : i32, i32
  }
  func.func @transform_5(%arg0: i32) -> (i32, i32) {
    %c0_i32 = arith.constant 0 : i32
    %c0_i32_0 = arith.constant 0 : i32
    return %arg0, %c0_i32 : i32, i32
  }
}

module attributes {stable_mosaic.version = 11 : i64} {
  func.func @_mlp_fused_kernel(%arg0: i32, %arg1: memref<8x128xbf16, #tpu.memory_space<vmem>>, %arg2: memref<128x128xbf16, #tpu.memory_space<vmem>>, %arg3: memref<128x128xbf16, #tpu.memory_space<vmem>>, %arg4: memref<1x128xf32, #tpu.memory_space<vmem>>, %arg5: memref<1x128xf32, #tpu.memory_space<vmem>>, %arg6: memref<8x128xf32, #tpu.memory_space<vmem>>, %arg7: memref<8x128xbf16, #tpu.memory_space<vmem>>) attributes {dimension_semantics = [#tpu.dimension_semantics<parallel>], iteration_bounds = array<i64: 1>, scalar_prefetch = 0 : i64, scratch_operands = 1 : i64, tpu.core_type = #tpu.core_type<tc>, window_params = [{transform_indices = @transform_0, window_bounds = array<i64: 8, 128>}, {pipeline_mode = #tpu.pipeline_mode<synchronous>, transform_indices = @transform_1, window_bounds = array<i64: 128, 128>}, {pipeline_mode = #tpu.pipeline_mode<synchronous>, transform_indices = @transform_2, window_bounds = array<i64: 128, 128>}, {pipeline_mode = #tpu.pipeline_mode<synchronous>, transform_indices = @transform_3, window_bounds = array<i64: 1, 128>}, {pipeline_mode = #tpu.pipeline_mode<synchronous>, transform_indices = @transform_4, window_bounds = array<i64: 1, 128>}, {transform_indices = @transform_5, window_bounds = array<i64: 8, 128>}]} {
    %c0 = arith.constant 0 : index
    %c0_0 = arith.constant 0 : index
    %0 = vector.load %arg1[%c0, %c0_0] : memref<8x128xbf16, #tpu.memory_space<vmem>>, vector<8x128xbf16>
    %c0_1 = arith.constant 0 : index
    %c0_2 = arith.constant 0 : index
    %1 = vector.load %arg2[%c0_1, %c0_2] : memref<128x128xbf16, #tpu.memory_space<vmem>>, vector<128x128xbf16>
    %cst = arith.constant dense<0.000000e+00> : vector<8x128xf32>
    %2 = tpu.matmul %0, %1, %cst {dimension_numbers = #tpu.dot_dimension_numbers<[1], [0], [0], [1], [0, 0, 1, 1], [], []>} : vector<8x128xbf16>, vector<128x128xbf16>, vector<8x128xf32> -> vector<8x128xf32>
    %c0_3 = arith.constant 0 : index
    %c0_4 = arith.constant 0 : index
    %3 = vector.load %arg4[%c0_3, %c0_4] : memref<1x128xf32, #tpu.memory_space<vmem>>, vector<1x128xf32>
    %4 = vector.broadcast %3 : vector<1x128xf32> to vector<8x128xf32>
    %5 = arith.addf %2, %4 : vector<8x128xf32>
    %cst_5 = arith.constant 0.000000e+00 : f32
    %6 = vector.broadcast %cst_5 : f32 to vector<8x128xf32>
    %7 = arith.maximumf %5, %6 : vector<8x128xf32>
    %8 = arith.truncf %7 : vector<8x128xf32> to vector<8x128xbf16>
    %c0_6 = arith.constant 0 : index
    %c0_7 = arith.constant 0 : index
    %9 = vector.load %arg7[%c0_6, %c0_7] : memref<8x128xbf16, #tpu.memory_space<vmem>>, vector<8x128xbf16>
    tpu.vector_store %arg7[%c0_6, %c0_7], %8 {strides = array<i32>} : memref<8x128xbf16, #tpu.memory_space<vmem>>, vector<8x128xbf16>,
    %c0_8 = arith.constant 0 : index
    %c0_9 = arith.constant 0 : index
    %10 = vector.load %arg7[%c0_8, %c0_9] : memref<8x128xbf16, #tpu.memory_space<vmem>>, vector<8x128xbf16>
    %c0_10 = arith.constant 0 : index
    %c0_11 = arith.constant 0 : index
    %11 = vector.load %arg3[%c0_10, %c0_11] : memref<128x128xbf16, #tpu.memory_space<vmem>>, vector<128x128xbf16>
    %cst_12 = arith.constant dense<0.000000e+00> : vector<8x128xf32>
    %12 = tpu.matmul %10, %11, %cst_12 {dimension_numbers = #tpu.dot_dimension_numbers<[1], [0], [0], [1], [0, 0, 1, 1], [], []>} : vector<8x128xbf16>, vector<128x128xbf16>, vector<8x128xf32> -> vector<8x128xf32>
    %c0_13 = arith.constant 0 : index
    %c0_14 = arith.constant 0 : index
    %13 = vector.load %arg5[%c0_13, %c0_14] : memref<1x128xf32, #tpu.memory_space<vmem>>, vector<1x128xf32>
    %14 = vector.broadcast %13 : vector<1x128xf32> to vector<8x128xf32>
    %15 = arith.addf %12, %14 : vector<8x128xf32>
    %cst_15 = arith.constant 0.000000e+00 : f32
    %16 = vector.broadcast %cst_15 : f32 to vector<8x128xf32>
    %17 = arith.maximumf %15, %16 : vector<8x128xf32>
    %c0_16 = arith.constant 0 : index
    %c0_17 = arith.constant 0 : index
    %18 = vector.load %arg6[%c0_16, %c0_17] : memref<8x128xf32, #tpu.memory_space<vmem>>, vector<8x128xf32>
    tpu.vector_store %arg6[%c0_16, %c0_17], %17 {strides = array<i32>} : memref<8x128xf32, #tpu.memory_space<vmem>>, vector<8x128xf32>,
    return
  }
  func.func @transform_0(%arg0: i32) -> (i32, i32) {
    %c0_i32 = arith.constant 0 : i32
    %c0_i32_0 = arith.constant 0 : i32
    return %arg0, %c0_i32 : i32, i32
  }
  func.func @transform_1(%arg0: i32) -> (i32, i32) {
    %c0_i32 = arith.constant 0 : i32
    %c0_i32_0 = arith.constant 0 : i32
    %c0_i32_1 = arith.constant 0 : i32
    return %c0_i32, %c0_i32_0 : i32, i32
  }
  func.func @transform_2(%arg0: i32) -> (i32, i32) {
    %c0_i32 = arith.constant 0 : i32
    %c0_i32_0 = arith.constant 0 : i32
    %c0_i32_1 = arith.constant 0 : i32
    return %c0_i32, %c0_i32_0 : i32, i32
  }
  func.func @transform_3(%arg0: i32) -> (i32, i32) {
    %c0_i32 = arith.constant 0 : i32
    %c0_i32_0 = arith.constant 0 : i32
    %c0_i32_1 = arith.constant 0 : i32
    return %c0_i32, %c0_i32_0 : i32, i32
  }
  func.func @transform_4(%arg0: i32) -> (i32, i32) {
    %c0_i32 = arith.constant 0 : i32
    %c0_i32_0 = arith.constant 0 : i32
    %c0_i32_1 = arith.constant 0 : i32
    return %c0_i32, %c0_i32_0 : i32, i32
  }
  func.func @transform_5(%arg0: i32) -> (i32, i32) {
    %c0_i32 = arith.constant 0 : i32
    %c0_i32_0 = arith.constant 0 : i32
    return %arg0, %c0_i32 : i32, i32
  }
}

</mosaic_0001>

<llo_original>
// kernel: tpu_custom_call.1
$region0: #{tpu_custom_call.1}
  #allocation0 [shape = 'u32[]', space=smem, size = 0x4, offset = 0x4, fixed_abs, tag = 'smem constant byte address 0x4 - core index']
  #allocation1 [shape = 'u32[144,128]{1,0:T(1,128)}', space=vmem, size = 0x12000, scoped, tag = 'internal scratch']
  #allocation2 [shape = 'bf16[8,128]{1,0:T(8,128)(2,1)}', space=vmem, size = 0x800, scoped, tag = 'scratch operand']
  %s0 = inlined_call_operand.hbm [shape: bf16[8,128], index: 0, kind: input, shape index: {}]
  %s1 = inlined_call_operand.hbm [shape: bf16[128,128], index: 1, kind: input, shape index: {}]
  %s2 = inlined_call_operand.hbm [shape: bf16[128,128], index: 2, kind: input, shape index: {}]
  %s3 = inlined_call_operand.vmem [shape: f32[1,128], index: 3, kind: input, shape index: {}]
  %s4 = inlined_call_operand.vmem [shape: f32[1,128], index: 4, kind: input, shape index: {}]
  %s5 = inlined_call_operand.hbm [shape: f32[8,128], index: 5, kind: output, shape index: {}]
  %s6 = sld [smem:[#allocation0]]
  $region42: #{tpu_custom_call.1} parent=0
    _
  %s8 = ssub.s32 1, %s6
  %s9 = scalar_select 0, %s8, %s6
  $region1: #{tpu_custom_call.1} parent=0
    #allocation3 [shape = 'u8[2048]{0}', space=vmem, size = 0x800, scoped, tag = 'input window, operand 0, single buffered']
    #allocation4 [shape = 's32[1]{0}', space=sflag, size = 0x4, scoped, tag = 'scoped memory for tpu_custom_call.1']
    #allocation5 [shape = 's32[1]{0}', space=sflag, size = 0x4, scoped, tag = 'scoped memory for tpu_custom_call.1']
    #allocation6 [shape = 'u8[32768]{0}', space=vmem, size = 0x8000, scoped, tag = 'input window, operand 1, single buffered']
    #allocation7 [shape = 's32[1]{0}', space=sflag, size = 0x4, scoped, tag = 'scoped memory for tpu_custom_call.1']
    #allocation8 [shape = 'u8[32768]{0}', space=vmem, size = 0x8000, scoped, tag = 'input window, operand 2, single buffered']
    #allocation9 [shape = 'u8[4096]{0}', space=vmem, size = 0x1000, scoped, tag = 'output window, operand 0, single buffered']
    %10 = vsyncpa [#allocation4], 0
    %11 = vsyncpa [#allocation7], 0
    %12 = vsyncpa [#allocation5], 0
    // Predicated region
    $region2: #{tpu_custom_call.1} parent=1 // pred_check
      _
    $region3: #{tpu_custom_call.1} parent=1 // pred_check_branch
      %14 = sbr.rel (0) target = $region5
    $region4: #{tpu_custom_call.1} parent=1 // pred_region
      %s16 = ssub.s32 64, 64
      %17 = vsyncadd [#allocation4], %s16
      %s19 = sshll.u32 [#allocation3], 4
      %s20 = int_to_ptr.vmem [resolvable:$true] %s19
      %22 = dma.hbm_to_vmem [thread:$0]  %s0, 64, %s20, [#allocation4]
    $region5: #{tpu_custom_call.1} parent=1 // pred_fallthru
      _
    // Predicated region
    $region6: #{tpu_custom_call.1} parent=1 // pred_check
      _
    $region7: #{tpu_custom_call.1} parent=1 // pred_check_branch
      %24 = sbr.rel (0) target = $region9
    $region8: #{tpu_custom_call.1} parent=1 // pred_region
      %s26 = ssub.s32 1024, 1024
      %27 = vsyncadd [#allocation7], %s26
      %s28 = sshll.u32 [#allocation6], 4
      %s29 = int_to_ptr.vmem [resolvable:$true] %s28
      %34 = dma.hbm_to_vmem [thread:$0]  %s1, 1024, %s29, [#allocation7], 64, 64, 4
    $region9: #{tpu_custom_call.1} parent=1 // pred_fallthru
      _
    // Predicated region
    $region10: #{tpu_custom_call.1} parent=1 // pred_check
      _
    $region11: #{tpu_custom_call.1} parent=1 // pred_check_branch
      %36 = sbr.rel (0) target = $region13
    $region12: #{tpu_custom_call.1} parent=1 // pred_region
      %s38 = ssub.s32 1024, 1024
      %39 = vsyncadd [#allocation7], %s38
      %s40 = sshll.u32 [#allocation8], 4
      %s41 = int_to_ptr.vmem [resolvable:$true] %s40
      %46 = dma.hbm_to_vmem [thread:$0]  %s2, 1024, %s41, [#allocation7], 64, 64, 4
    $region13: #{tpu_custom_call.1} parent=1 // pred_fallthru
      _
    // Predicated region
    $region14: #{tpu_custom_call.1} parent=1 // pred_check
      _
    $region15: #{tpu_custom_call.1} parent=1 // pred_check_branch
      %48 = sbr.rel (0) target = $region17
    $region16: #{tpu_custom_call.1} parent=1 // pred_region
      _
    $region17: #{tpu_custom_call.1} parent=1 // pred_fallthru
      _
    // Predicated region
    $region18: #{tpu_custom_call.1} parent=1 // pred_check
      _
    $region19: #{tpu_custom_call.1} parent=1 // pred_check_branch
      %50 = sbr.rel (0) target = $region21
    $region20: #{tpu_custom_call.1} parent=1 // pred_region
      _
    $region21: #{tpu_custom_call.1} parent=1 // pred_fallthru
      _
    // Predicated region
    $region22: #{tpu_custom_call.1} parent=1 // pred_check
      _
    $region23: #{tpu_custom_call.1} parent=1 // pred_check_branch
      %52 = sbr.rel (0) target = $region25
    $region24: #{tpu_custom_call.1} parent=1 // pred_region
      %53 = dma.done [#allocation4], 64
    $region25: #{tpu_custom_call.1} parent=1 // pred_fallthru
      _
    // Predicated region
    $region26: #{tpu_custom_call.1} parent=1 // pred_check
      _
    $region27: #{tpu_custom_call.1} parent=1 // pred_check_branch
      %55 = sbr.rel (0) target = $region29
    $region28: #{tpu_custom_call.1} parent=1 // pred_region
      %56 = dma.done [#allocation7], 1024
    $region29: #{tpu_custom_call.1} parent=1 // pred_fallthru
      _
    // Predicated region
    $region30: #{tpu_custom_call.1} parent=1 // pred_check
      _
    $region31: #{tpu_custom_call.1} parent=1 // pred_check_branch
      %58 = sbr.rel (0) target = $region33
    $region32: #{tpu_custom_call.1} parent=1 // pred_region
      %59 = dma.done [#allocation7], 1024
    $region33: #{tpu_custom_call.1} parent=1 // pred_fallthru
      _
    %v61 = vld [vmem:[#allocation3] sm:$0xf]
    %v62 = vld [vmem:[#allocation6] sm:$0xf]
    %v63 = vld [vmem:[#allocation6 + $0x4] sm:$0xf]
    %v64 = vld [vmem:[#allocation6 + $0x8] sm:$0xf]
    %v65 = vld [vmem:[#allocation6 + $0xc] sm:$0xf]
    %v66 = vld [vmem:[#allocation6 + $0x10] sm:$0xf]
    %v67 = vld [vmem:[#allocation6 + $0x14] sm:$0xf]
    %v68 = vld [vmem:[#allocation6 + $0x18] sm:$0xf]
    %v69 = vld [vmem:[#allocation6 + $0x1c] sm:$0xf]
    %v70 = vld [vmem:[#allocation6 + $0x20] sm:$0xf]
    %v71 = vld [vmem:[#allocation6 + $0x24] sm:$0xf]
    %v72 = vld [vmem:[#allocation6 + $0x28] sm:$0xf]
    %v73 = vld [vmem:[#allocation6 + $0x2c] sm:$0xf]
    %v74 = vld [vmem:[#allocation6 + $0x30] sm:$0xf]
    %v75 = vld [vmem:[#allocation6 + $0x34] sm:$0xf]
    %v76 = vld [vmem:[#allocation6 + $0x38] sm:$0xf]
    %v77 = vld [vmem:[#allocation6 + $0x3c] sm:$0xf]
    %v78 = vld [vmem:[%s3] sm:$0x1]
    %v80 = vlaneseq
    %v81 = vshrl.u32 %v80, 7
    %v82 = vsub.s32 0, %v81
    %v83 = vrot.slane %v78, %v82
    %v101 = vunpack.c.l.b16 %v62
    %v102 = vunpack.c.l.b16 %v63
    %v103 = vunpack.c.l.b16 %v64
    %v104 = vunpack.c.l.b16 %v65
    %v105 = vunpack.c.l.b16 %v66
    %v106 = vunpack.c.l.b16 %v67
    %v107 = vunpack.c.l.b16 %v68
    %v108 = vunpack.c.l.b16 %v69
    %v109 = vunpack.c.l.b16 %v70
    %v110 = vunpack.c.l.b16 %v71
    %v111 = vunpack.c.l.b16 %v72
    %v112 = vunpack.c.l.b16 %v73
    %v113 = vunpack.c.l.b16 %v74
    %v114 = vunpack.c.l.b16 %v75
    %v115 = vunpack.c.l.b16 %v76
    %v116 = vunpack.c.l.b16 %v77
    %v117 = vpack.c.b16 %v102, %v101
    %v118 = vpack.c.b16 %v104, %v103
    %v119 = vpack.c.b16 %v106, %v105
    %v120 = vpack.c.b16 %v108, %v107
    %v121 = vpack.c.b16 %v110, %v109
    %v122 = vpack.c.b16 %v112, %v111
    %v123 = vpack.c.b16 %v114, %v113
    %v124 = vpack.c.b16 %v116, %v115
    %133 = vmatprep.subr.bf16.mxu0 0
    %134 = vmatpush1.bf16.msra.mxu0 %v117
    %135 = vmatprep.subr.bf16.mxu0 0
    %136 = vmatpush1.bf16.msra.mxu0 %v118
    %137 = vmatprep.subr.bf16.mxu0 0
    %138 = vmatpush1.bf16.msra.mxu0 %v119
    %139 = vmatprep.subr.bf16.mxu0 0
    %140 = vmatpush1.bf16.msra.mxu0 %v120
    %141 = vmatprep.subr.bf16.mxu0 0
    %142 = vmatpush1.bf16.msra.mxu0 %v121
    %143 = vmatprep.subr.bf16.mxu0 0
    %144 = vmatpush1.bf16.msra.mxu0 %v122
    %145 = vmatprep.subr.bf16.mxu0 0
    %146 = vmatpush1.bf16.msra.mxu0 %v123
    %147 = vmatprep.subr.bf16.mxu0 0
    %148 = vmatpush1.bf16.msra.mxu0 %v124
    %149 = vmatprep.subr.bf16.mxu0 0
    %150 = vmatpush1.bf16.msra.mxu0 0
    %151 = vmatprep.subr.bf16.mxu0 0
    %152 = vmatpush1.bf16.msra.mxu0 0
    %153 = vmatprep.subr.bf16.mxu0 0
    %154 = vmatpush1.bf16.msra.mxu0 0
    %155 = vmatprep.subr.bf16.mxu0 0
    %156 = vmatpush1.bf16.msra.mxu0 0
    %157 = vmatprep.subr.bf16.mxu0 0
    %158 = vmatpush1.bf16.msra.mxu0 0
    %159 = vmatprep.subr.bf16.mxu0 0
    %160 = vmatpush1.bf16.msra.mxu0 0
    %161 = vmatprep.subr.bf16.mxu0 0
    %162 = vmatpush1.bf16.msra.mxu0 0
    %163 = vmatprep.subr.bf16.mxu0 0
    %164 = vmatpush1.bf16.msra.mxu0 0
    %165 = vmatprep.mubr.bf16.mxu0 0
    %166 = vmatmul.mubr.bf16.gmra.mrb[0].mxu0 %v61
    %v167 = vpop.f32.mrb[0].mxu0
    %v168 = vadd.f32 %v83, %v167
    %v169 = vpop.f32.mrb[0].mxu0
    %v170 = vpop.f32.mrb[0].mxu0
    %v171 = vpop.f32.mrb[0].mxu0
    %172 = vdwg.mxu0
    %v173 = vmax.f32 %v168, 0.0
    %v174 = vpack.c.bf16 %v173, %v173
    %175 = vst [vmem:[#allocation2] sm:$0xf] %v174
    %v176 = vld [vmem:[#allocation2] sm:$0xf]
    %v177 = vld [vmem:[#allocation8] sm:$0xf]
    %v178 = vld [vmem:[#allocation8 + $0x4] sm:$0xf]
    %v179 = vld [vmem:[#allocation8 + $0x8] sm:$0xf]
    %v180 = vld [vmem:[#allocation8 + $0xc] sm:$0xf]
    %v181 = vld [vmem:[#allocation8 + $0x10] sm:$0xf]
    %v182 = vld [vmem:[#allocation8 + $0x14] sm:$0xf]
    %v183 = vld [vmem:[#allocation8 + $0x18] sm:$0xf]
    %v184 = vld [vmem:[#allocation8 + $0x1c] sm:$0xf]
    %v185 = vld [vmem:[#allocation8 + $0x20] sm:$0xf]
    %v186 = vld [vmem:[#allocation8 + $0x24] sm:$0xf]
    %v187 = vld [vmem:[#allocation8 + $0x28] sm:$0xf]
    %v188 = vld [vmem:[#allocation8 + $0x2c] sm:$0xf]
    %v189 = vld [vmem:[#allocation8 + $0x30] sm:$0xf]
    %v190 = vld [vmem:[#allocation8 + $0x34] sm:$0xf]
    %v191 = vld [vmem:[#allocation8 + $0x38] sm:$0xf]
    %v192 = vld [vmem:[#allocation8 + $0x3c] sm:$0xf]
    %v193 = vld [vmem:[%s4] sm:$0x1]
    %v195 = vlaneseq
    %v196 = vshrl.u32 %v195, 7
    %v197 = vsub.s32 0, %v196
    %v198 = vrot.slane %v193, %v197
    %v216 = vunpack.c.l.b16 %v177
    %v217 = vunpack.c.l.b16 %v178
    %v218 = vunpack.c.l.b16 %v179
    %v219 = vunpack.c.l.b16 %v180
    %v220 = vunpack.c.l.b16 %v181
    %v221 = vunpack.c.l.b16 %v182
    %v222 = vunpack.c.l.b16 %v183
    %v223 = vunpack.c.l.b16 %v184
    %v224 = vunpack.c.l.b16 %v185
    %v225 = vunpack.c.l.b16 %v186
    %v226 = vunpack.c.l.b16 %v187
    %v227 = vunpack.c.l.b16 %v188
    %v228 = vunpack.c.l.b16 %v189
    %v229 = vunpack.c.l.b16 %v190
    %v230 = vunpack.c.l.b16 %v191
    %v231 = vunpack.c.l.b16 %v192
    %v232 = vpack.c.b16 %v217, %v216
    %v233 = vpack.c.b16 %v219, %v218
    %v234 = vpack.c.b16 %v221, %v220
    %v235 = vpack.c.b16 %v223, %v222
    %v236 = vpack.c.b16 %v225, %v224
    %v237 = vpack.c.b16 %v227, %v226
    %v238 = vpack.c.b16 %v229, %v228
    %v239 = vpack.c.b16 %v231, %v230
    %248 = vmatprep.subr.bf16.mxu0 0
    %249 = vmatpush1.bf16.msra.mxu0 %v232
    %250 = vmatprep.subr.bf16.mxu0 0
    %251 = vmatpush1.bf16.msra.mxu0 %v233
    %252 = vmatprep.subr.bf16.mxu0 0
    %253 = vmatpush1.bf16.msra.mxu0 %v234
    %254 = vmatprep.subr.bf16.mxu0 0
    %255 = vmatpush1.bf16.msra.mxu0 %v235
    %256 = vmatprep.subr.bf16.mxu0 0
    %257 = vmatpush1.bf16.msra.mxu0 %v236
    %258 = vmatprep.subr.bf16.mxu0 0
    %259 = vmatpush1.bf16.msra.mxu0 %v237
    %260 = vmatprep.subr.bf16.mxu0 0
    %261 = vmatpush1.bf16.msra.mxu0 %v238
    %262 = vmatprep.subr.bf16.mxu0 0
    %263 = vmatpush1.bf16.msra.mxu0 %v239
    %264 = vmatprep.subr.bf16.mxu0 0
    %265 = vmatpush1.bf16.msra.mxu0 0
    %266 = vmatprep.subr.bf16.mxu0 0
    %267 = vmatpush1.bf16.msra.mxu0 0
    %268 = vmatprep.subr.bf16.mxu0 0
    %269 = vmatpush1.bf16.msra.mxu0 0
    %270 = vmatprep.subr.bf16.mxu0 0
    %271 = vmatpush1.bf16.msra.mxu0 0
    %272 = vmatprep.subr.bf16.mxu0 0
    %273 = vmatpush1.bf16.msra.mxu0 0
    %274 = vmatprep.subr.bf16.mxu0 0
    %275 = vmatpush1.bf16.msra.mxu0 0
    %276 = vmatprep.subr.bf16.mxu0 0
    %277 = vmatpush1.bf16.msra.mxu0 0
    %278 = vmatprep.subr.bf16.mxu0 0
    %279 = vmatpush1.bf16.msra.mxu0 0
    %280 = vmatprep.mubr.bf16.mxu0 0
    %281 = vmatmul.mubr.bf16.gmra.mrb[0].mxu0 %v176
    %v282 = vpop.f32.mrb[0].mxu0
    %v283 = vadd.f32 %v198, %v282
    %v284 = vpop.f32.mrb[0].mxu0
    %v285 = vpop.f32.mrb[0].mxu0
    %v286 = vpop.f32.mrb[0].mxu0
    %287 = vdwg.mxu0
    %v288 = vmax.f32 %v283, 0.0
    %289 = vst [vmem:[#allocation9] sm:$0xff] %v288
    // Predicated region
    $region34: #{tpu_custom_call.1} parent=1 // pred_check
      _
    $region35: #{tpu_custom_call.1} parent=1 // pred_check_branch
      %291 = sbr.rel (0) target = $region37
    $region36: #{tpu_custom_call.1} parent=1 // pred_region
      %s293 = ssub.s32 128, 128
      %294 = vsyncadd [#allocation5], %s293
      %s296 = sshll.u32 [#allocation9], 4
      %s297 = int_to_ptr.vmem [resolvable:$true] %s296
      %299 = dma.vmem_to_hbm [thread:$0]  %s297, 128, %s5, [#allocation5]
    $region37: #{tpu_custom_call.1} parent=1 // pred_fallthru
      _
    // Predicated region
    $region38: #{tpu_custom_call.1} parent=1 // pred_check
      _
    $region39: #{tpu_custom_call.1} parent=1 // pred_check_branch
      %301 = sbr.rel (0) target = $region41
    $region40: #{tpu_custom_call.1} parent=1 // pred_region
      %302 = dma.done [#allocation5], 128
    $region41: #{tpu_custom_call.1} parent=1 // pred_fallthru
      _
    %303 = vsyncpa [#allocation4], 1
    %304 = vsyncpa [#allocation7], 1
    %305 = vsyncpa [#allocation5], 1

// kernel: tpu_custom_call.1
$region0: #{tpu_custom_call.1}
  #allocation0 [shape = 'u32[]', space=smem, size = 0x4, offset = 0x4, fixed_abs, tag = 'smem constant byte address 0x4 - core index']
  #allocation1 [shape = 'u32[144,128]{1,0:T(1,128)}', space=vmem, size = 0x12000, scoped, tag = 'internal scratch']
  #allocation2 [shape = 'bf16[8,128]{1,0:T(8,128)(2,1)}', space=vmem, size = 0x800, scoped, tag = 'scratch operand']
  %s0 = inlined_call_operand.hbm [shape: bf16[8,128], index: 0, kind: input, shape index: {}]
  %s1 = inlined_call_operand.hbm [shape: bf16[128,128], index: 1, kind: input, shape index: {}]
  %s2 = inlined_call_operand.hbm [shape: bf16[128,128], index: 2, kind: input, shape index: {}]
  %s3 = inlined_call_operand.vmem [shape: f32[1,128], index: 3, kind: input, shape index: {}]
  %s4 = inlined_call_operand.vmem [shape: f32[1,128], index: 4, kind: input, shape index: {}]
  %s5 = inlined_call_operand.hbm [shape: f32[8,128], index: 5, kind: output, shape index: {}]
  %s6 = sld [smem:[#allocation0]]
  $region42: #{tpu_custom_call.1} parent=0
    _
  %s8 = ssub.s32 1, %s6
  %s9 = scalar_select 0, %s8, %s6
  $region1: #{tpu_custom_call.1} parent=0
    #allocation3 [shape = 'u8[2048]{0}', space=vmem, size = 0x800, scoped, tag = 'input window, operand 0, single buffered']
    #allocation4 [shape = 's32[1]{0}', space=sflag, size = 0x4, scoped, tag = 'scoped memory for tpu_custom_call.1']
    #allocation5 [shape = 's32[1]{0}', space=sflag, size = 0x4, scoped, tag = 'scoped memory for tpu_custom_call.1']
    #allocation6 [shape = 'u8[32768]{0}', space=vmem, size = 0x8000, scoped, tag = 'input window, operand 1, single buffered']
    #allocation7 [shape = 's32[1]{0}', space=sflag, size = 0x4, scoped, tag = 'scoped memory for tpu_custom_call.1']
    #allocation8 [shape = 'u8[32768]{0}', space=vmem, size = 0x8000, scoped, tag = 'input window, operand 2, single buffered']
    #allocation9 [shape = 'u8[4096]{0}', space=vmem, size = 0x1000, scoped, tag = 'output window, operand 0, single buffered']
    %10 = vsyncpa [#allocation4], 0
    %11 = vsyncpa [#allocation7], 0
    %12 = vsyncpa [#allocation5], 0
    // Predicated region
    $region2: #{tpu_custom_call.1} parent=1 // pred_check
      _
    $region3: #{tpu_custom_call.1} parent=1 // pred_check_branch
      %14 = sbr.rel (0) target = $region5
    $region4: #{tpu_custom_call.1} parent=1 // pred_region
      %s16 = ssub.s32 64, 64
      %17 = vsyncadd [#allocation4], %s16
      %s19 = sshll.u32 [#allocation3], 4
      %s20 = int_to_ptr.vmem [resolvable:$true] %s19
      %22 = dma.hbm_to_vmem [thread:$0]  %s0, 64, %s20, [#allocation4]
    $region5: #{tpu_custom_call.1} parent=1 // pred_fallthru
      _
    // Predicated region
    $region6: #{tpu_custom_call.1} parent=1 // pred_check
      _
    $region7: #{tpu_custom_call.1} parent=1 // pred_check_branch
      %24 = sbr.rel (0) target = $region9
    $region8: #{tpu_custom_call.1} parent=1 // pred_region
      %s26 = ssub.s32 1024, 1024
      %27 = vsyncadd [#allocation7], %s26
      %s28 = sshll.u32 [#allocation6], 4
      %s29 = int_to_ptr.vmem [resolvable:$true] %s28
      %34 = dma.hbm_to_vmem [thread:$0]  %s1, 1024, %s29, [#allocation7], 64, 64, 4
    $region9: #{tpu_custom_call.1} parent=1 // pred_fallthru
      _
    // Predicated region
    $region10: #{tpu_custom_call.1} parent=1 // pred_check
      _
    $region11: #{tpu_custom_call.1} parent=1 // pred_check_branch
      %36 = sbr.rel (0) target = $region13
    $region12: #{tpu_custom_call.1} parent=1 // pred_region
      %s38 = ssub.s32 1024, 1024
      %39 = vsyncadd [#allocation7], %s38
      %s40 = sshll.u32 [#allocation8], 4
      %s41 = int_to_ptr.vmem [resolvable:$true] %s40
      %46 = dma.hbm_to_vmem [thread:$0]  %s2, 1024, %s41, [#allocation7], 64, 64, 4
    $region13: #{tpu_custom_call.1} parent=1 // pred_fallthru
      _
    // Predicated region
    $region14: #{tpu_custom_call.1} parent=1 // pred_check
      _
    $region15: #{tpu_custom_call.1} parent=1 // pred_check_branch
      %48 = sbr.rel (0) target = $region17
    $region16: #{tpu_custom_call.1} parent=1 // pred_region
      _
    $region17: #{tpu_custom_call.1} parent=1 // pred_fallthru
      _
    // Predicated region
    $region18: #{tpu_custom_call.1} parent=1 // pred_check
      _
    $region19: #{tpu_custom_call.1} parent=1 // pred_check_branch
      %50 = sbr.rel (0) target = $region21
    $region20: #{tpu_custom_call.1} parent=1 // pred_region
      _
    $region21: #{tpu_custom_call.1} parent=1 // pred_fallthru
      _
    // Predicated region
    $region22: #{tpu_custom_call.1} parent=1 // pred_check
      _
    $region23: #{tpu_custom_call.1} parent=1 // pred_check_branch
      %52 = sbr.rel (0) target = $region25
    $region24: #{tpu_custom_call.1} parent=1 // pred_region
      %53 = dma.done [#allocation4], 64
    $region25: #{tpu_custom_call.1} parent=1 // pred_fallthru
      _
    // Predicated region
    $region26: #{tpu_custom_call.1} parent=1 // pred_check
      _
    $region27: #{tpu_custom_call.1} parent=1 // pred_check_branch
      %55 = sbr.rel (0) target = $region29
    $region28: #{tpu_custom_call.1} parent=1 // pred_region
      %56 = dma.done [#allocation7], 1024
    $region29: #{tpu_custom_call.1} parent=1 // pred_fallthru
      _
    // Predicated region
    $region30: #{tpu_custom_call.1} parent=1 // pred_check
      _
    $region31: #{tpu_custom_call.1} parent=1 // pred_check_branch
      %58 = sbr.rel (0) target = $region33
    $region32: #{tpu_custom_call.1} parent=1 // pred_region
      %59 = dma.done [#allocation7], 1024
    $region33: #{tpu_custom_call.1} parent=1 // pred_fallthru
      _
    %v61 = vld [vmem:[#allocation3] sm:$0xf]
    %v62 = vld [vmem:[#allocation6] sm:$0xf]
    %v63 = vld [vmem:[#allocation6 + $0x4] sm:$0xf]
    %v64 = vld [vmem:[#allocation6 + $0x8] sm:$0xf]
    %v65 = vld [vmem:[#allocation6 + $0xc] sm:$0xf]
    %v66 = vld [vmem:[#allocation6 + $0x10] sm:$0xf]
    %v67 = vld [vmem:[#allocation6 + $0x14] sm:$0xf]
    %v68 = vld [vmem:[#allocation6 + $0x18] sm:$0xf]
    %v69 = vld [vmem:[#allocation6 + $0x1c] sm:$0xf]
    %v70 = vld [vmem:[#allocation6 + $0x20] sm:$0xf]
    %v71 = vld [vmem:[#allocation6 + $0x24] sm:$0xf]
    %v72 = vld [vmem:[#allocation6 + $0x28] sm:$0xf]
    %v73 = vld [vmem:[#allocation6 + $0x2c] sm:$0xf]
    %v74 = vld [vmem:[#allocation6 + $0x30] sm:$0xf]
    %v75 = vld [vmem:[#allocation6 + $0x34] sm:$0xf]
    %v76 = vld [vmem:[#allocation6 + $0x38] sm:$0xf]
    %v77 = vld [vmem:[#allocation6 + $0x3c] sm:$0xf]
    %v78 = vld [vmem:[%s3] sm:$0x1]
    %v80 = vlaneseq
    %v81 = vshrl.u32 %v80, 7
    %v82 = vsub.s32 0, %v81
    %v83 = vrot.slane %v78, %v82
    %v101 = vunpack.c.l.b16 %v62
    %v102 = vunpack.c.l.b16 %v63
    %v103 = vunpack.c.l.b16 %v64
    %v104 = vunpack.c.l.b16 %v65
    %v105 = vunpack.c.l.b16 %v66
    %v106 = vunpack.c.l.b16 %v67
    %v107 = vunpack.c.l.b16 %v68
    %v108 = vunpack.c.l.b16 %v69
    %v109 = vunpack.c.l.b16 %v70
    %v110 = vunpack.c.l.b16 %v71
    %v111 = vunpack.c.l.b16 %v72
    %v112 = vunpack.c.l.b16 %v73
    %v113 = vunpack.c.l.b16 %v74
    %v114 = vunpack.c.l.b16 %v75
    %v115 = vunpack.c.l.b16 %v76
    %v116 = vunpack.c.l.b16 %v77
    %v117 = vpack.c.b16 %v102, %v101
    %v118 = vpack.c.b16 %v104, %v103
    %v119 = vpack.c.b16 %v106, %v105
    %v120 = vpack.c.b16 %v108, %v107
    %v121 = vpack.c.b16 %v110, %v109
    %v122 = vpack.c.b16 %v112, %v111
    %v123 = vpack.c.b16 %v114, %v113
    %v124 = vpack.c.b16 %v116, %v115
    %133 = vmatprep.subr.bf16.mxu0 0
    %134 = vmatpush1.bf16.msra.mxu0 %v117
    %135 = vmatprep.subr.bf16.mxu0 0
    %136 = vmatpush1.bf16.msra.mxu0 %v118
    %137 = vmatprep.subr.bf16.mxu0 0
    %138 = vmatpush1.bf16.msra.mxu0 %v119
    %139 = vmatprep.subr.bf16.mxu0 0
    %140 = vmatpush1.bf16.msra.mxu0 %v120
    %141 = vmatprep.subr.bf16.mxu0 0
    %142 = vmatpush1.bf16.msra.mxu0 %v121
    %143 = vmatprep.subr.bf16.mxu0 0
    %144 = vmatpush1.bf16.msra.mxu0 %v122
    %145 = vmatprep.subr.bf16.mxu0 0
    %146 = vmatpush1.bf16.msra.mxu0 %v123
    %147 = vmatprep.subr.bf16.mxu0 0
    %148 = vmatpush1.bf16.msra.mxu0 %v124
    %149 = vmatprep.subr.bf16.mxu0 0
    %150 = vmatpush1.bf16.msra.mxu0 0
    %151 = vmatprep.subr.bf16.mxu0 0
    %152 = vmatpush1.bf16.msra.mxu0 0
    %153 = vmatprep.subr.bf16.mxu0 0
    %154 = vmatpush1.bf16.msra.mxu0 0
    %155 = vmatprep.subr.bf16.mxu0 0
    %156 = vmatpush1.bf16.msra.mxu0 0
    %157 = vmatprep.subr.bf16.mxu0 0
    %158 = vmatpush1.bf16.msra.mxu0 0
    %159 = vmatprep.subr.bf16.mxu0 0
    %160 = vmatpush1.bf16.msra.mxu0 0
    %161 = vmatprep.subr.bf16.mxu0 0
    %162 = vmatpush1.bf16.msra.mxu0 0
    %163 = vmatprep.subr.bf16.mxu0 0
    %164 = vmatpush1.bf16.msra.mxu0 0
    %165 = vmatprep.mubr.bf16.mxu0 0
    %166 = vmatmul.mubr.bf16.gmra.mrb[0].mxu0 %v61
    %v167 = vpop.f32.mrb[0].mxu0
    %v168 = vadd.f32 %v83, %v167
    %v169 = vpop.f32.mrb[0].mxu0
    %v170 = vpop.f32.mrb[0].mxu0
    %v171 = vpop.f32.mrb[0].mxu0
    %172 = vdwg.mxu0
    %v173 = vmax.f32 %v168, 0.0
    %v174 = vpack.c.bf16 %v173, %v173
    %175 = vst [vmem:[#allocation2] sm:$0xf] %v174
    %v176 = vld [vmem:[#allocation2] sm:$0xf]
    %v177 = vld [vmem:[#allocation8] sm:$0xf]
    %v178 = vld [vmem:[#allocation8 + $0x4] sm:$0xf]
    %v179 = vld [vmem:[#allocation8 + $0x8] sm:$0xf]
    %v180 = vld [vmem:[#allocation8 + $0xc] sm:$0xf]
    %v181 = vld [vmem:[#allocation8 + $0x10] sm:$0xf]
    %v182 = vld [vmem:[#allocation8 + $0x14] sm:$0xf]
    %v183 = vld [vmem:[#allocation8 + $0x18] sm:$0xf]
    %v184 = vld [vmem:[#allocation8 + $0x1c] sm:$0xf]
    %v185 = vld [vmem:[#allocation8 + $0x20] sm:$0xf]
    %v186 = vld [vmem:[#allocation8 + $0x24] sm:$0xf]
    %v187 = vld [vmem:[#allocation8 + $0x28] sm:$0xf]
    %v188 = vld [vmem:[#allocation8 + $0x2c] sm:$0xf]
    %v189 = vld [vmem:[#allocation8 + $0x30] sm:$0xf]
    %v190 = vld [vmem:[#allocation8 + $0x34] sm:$0xf]
    %v191 = vld [vmem:[#allocation8 + $0x38] sm:$0xf]
    %v192 = vld [vmem:[#allocation8 + $0x3c] sm:$0xf]
    %v193 = vld [vmem:[%s4] sm:$0x1]
    %v195 = vlaneseq
    %v196 = vshrl.u32 %v195, 7
    %v197 = vsub.s32 0, %v196
    %v198 = vrot.slane %v193, %v197
    %v216 = vunpack.c.l.b16 %v177
    %v217 = vunpack.c.l.b16 %v178
    %v218 = vunpack.c.l.b16 %v179
    %v219 = vunpack.c.l.b16 %v180
    %v220 = vunpack.c.l.b16 %v181
    %v221 = vunpack.c.l.b16 %v182
    %v222 = vunpack.c.l.b16 %v183
    %v223 = vunpack.c.l.b16 %v184
    %v224 = vunpack.c.l.b16 %v185
    %v225 = vunpack.c.l.b16 %v186
    %v226 = vunpack.c.l.b16 %v187
    %v227 = vunpack.c.l.b16 %v188
    %v228 = vunpack.c.l.b16 %v189
    %v229 = vunpack.c.l.b16 %v190
    %v230 = vunpack.c.l.b16 %v191
    %v231 = vunpack.c.l.b16 %v192
    %v232 = vpack.c.b16 %v217, %v216
    %v233 = vpack.c.b16 %v219, %v218
    %v234 = vpack.c.b16 %v221, %v220
    %v235 = vpack.c.b16 %v223, %v222
    %v236 = vpack.c.b16 %v225, %v224
    %v237 = vpack.c.b16 %v227, %v226
    %v238 = vpack.c.b16 %v229, %v228
    %v239 = vpack.c.b16 %v231, %v230
    %248 = vmatprep.subr.bf16.mxu0 0
    %249 = vmatpush1.bf16.msra.mxu0 %v232
    %250 = vmatprep.subr.bf16.mxu0 0
    %251 = vmatpush1.bf16.msra.mxu0 %v233
    %252 = vmatprep.subr.bf16.mxu0 0
    %253 = vmatpush1.bf16.msra.mxu0 %v234
    %254 = vmatprep.subr.bf16.mxu0 0
    %255 = vmatpush1.bf16.msra.mxu0 %v235
    %256 = vmatprep.subr.bf16.mxu0 0
    %257 = vmatpush1.bf16.msra.mxu0 %v236
    %258 = vmatprep.subr.bf16.mxu0 0
    %259 = vmatpush1.bf16.msra.mxu0 %v237
    %260 = vmatprep.subr.bf16.mxu0 0
    %261 = vmatpush1.bf16.msra.mxu0 %v238
    %262 = vmatprep.subr.bf16.mxu0 0
    %263 = vmatpush1.bf16.msra.mxu0 %v239
    %264 = vmatprep.subr.bf16.mxu0 0
    %265 = vmatpush1.bf16.msra.mxu0 0
    %266 = vmatprep.subr.bf16.mxu0 0
    %267 = vmatpush1.bf16.msra.mxu0 0
    %268 = vmatprep.subr.bf16.mxu0 0
    %269 = vmatpush1.bf16.msra.mxu0 0
    %270 = vmatprep.subr.bf16.mxu0 0
    %271 = vmatpush1.bf16.msra.mxu0 0
    %272 = vmatprep.subr.bf16.mxu0 0
    %273 = vmatpush1.bf16.msra.mxu0 0
    %274 = vmatprep.subr.bf16.mxu0 0
    %275 = vmatpush1.bf16.msra.mxu0 0
    %276 = vmatprep.subr.bf16.mxu0 0
    %277 = vmatpush1.bf16.msra.mxu0 0
    %278 = vmatprep.subr.bf16.mxu0 0
    %279 = vmatpush1.bf16.msra.mxu0 0
    %280 = vmatprep.mubr.bf16.mxu0 0
    %281 = vmatmul.mubr.bf16.gmra.mrb[0].mxu0 %v176
    %v282 = vpop.f32.mrb[0].mxu0
    %v283 = vadd.f32 %v198, %v282
    %v284 = vpop.f32.mrb[0].mxu0
    %v285 = vpop.f32.mrb[0].mxu0
    %v286 = vpop.f32.mrb[0].mxu0
    %287 = vdwg.mxu0
    %v288 = vmax.f32 %v283, 0.0
    %289 = vst [vmem:[#allocation9] sm:$0xff] %v288
    // Predicated region
    $region34: #{tpu_custom_call.1} parent=1 // pred_check
      _
    $region35: #{tpu_custom_call.1} parent=1 // pred_check_branch
      %291 = sbr.rel (0) target = $region37
    $region36: #{tpu_custom_call.1} parent=1 // pred_region
      %s293 = ssub.s32 128, 128
      %294 = vsyncadd [#allocation5], %s293
      %s296 = sshll.u32 [#allocation9], 4
      %s297 = int_to_ptr.vmem [resolvable:$true] %s296
      %299 = dma.vmem_to_hbm [thread:$0]  %s297, 128, %s5, [#allocation5]
    $region37: #{tpu_custom_call.1} parent=1 // pred_fallthru
      _
    // Predicated region
    $region38: #{tpu_custom_call.1} parent=1 // pred_check
      _
    $region39: #{tpu_custom_call.1} parent=1 // pred_check_branch
      %301 = sbr.rel (0) target = $region41
    $region40: #{tpu_custom_call.1} parent=1 // pred_region
      %302 = dma.done [#allocation5], 128
    $region41: #{tpu_custom_call.1} parent=1 // pred_fallthru
      _
    %303 = vsyncpa [#allocation4], 1
    %304 = vsyncpa [#allocation7], 1
    %305 = vsyncpa [#allocation5], 1

</llo_original>
